<compile_context>
chip_gen: v6e
topology: v6e:2x2x1
jax: 0.10.0
libtpu: 0.0.40
codegen_flags: <defaults>
</compile_context>

<pallas_src>
import functools
import math

import jax
import jax.numpy as jnp
from jax.experimental import pallas as pl
from jax.experimental.pallas import tpu as pltpu


# ----------------------------------------------------------------------------
# Pallas kernels
# ----------------------------------------------------------------------------

@functools.lru_cache(maxsize=None)
def _make_matmul_affine_kernel(relu: bool, has_residual: bool):
    """Fused (X @ W) * scale + bias [+ residual] [-> ReLU] kernel.

    Grid = (M tiles, N tiles, K tiles); K is the last ("arbitrary") axis and
    the f32 output block (resident across K) is used as the accumulator.
    """

    def kernel(x_ref, w_ref, s_ref, b_ref, *rest):
        if has_residual:
            res_ref, o_ref = rest
        else:
            (o_ref,) = rest

        k = pl.program_id(2)

        @pl.when(k == 0)
        def _():
            o_ref[...] = jnp.zeros_like(o_ref)

        # bf16 x bf16 -> f32 on the MXU.
        o_ref[...] += jnp.dot(
            x_ref[...], w_ref[...], preferred_element_type=jnp.float32
        )

        @pl.when(k == pl.num_programs(2) - 1)
        def _():
            y = o_ref[...] * s_ref[...] + b_ref[...]
            if has_residual:
                y = y + res_ref[...]
            if relu:
                y = jnp.maximum(y, 0.0)
            o_ref[...] = y

    return kernel


def _maxpool_kernel(x_ref, o_ref):
    # x_ref: [9, tm, C]  ->  o_ref: [tm, C]; pairwise max over the 9 taps.
    m = x_ref[0]
    for t in range(1, 9):
        m = jnp.maximum(m, x_ref[t])
    o_ref[...] = m


def _avgpool_kernel(x_ref, o_ref):
    # x_ref: [N, HW, tc] -> o_ref: [N, tc]
    o_ref[...] = jnp.mean(x_ref[...], axis=1)


# ----------------------------------------------------------------------------
# Tiling helpers
# ----------------------------------------------------------------------------

def _round_up(a: int, b: int) -> int:
    return ((a + b - 1) // b) * b


@functools.lru_cache(maxsize=None)
def _tile_targets():
    """(tm, tn, tk) targets per TPU generation."""
    try:
        kind = jax.devices()[0].device_kind.lower()
    except Exception:  # pragma: no cover - defensive
        kind = ""
    if "v5 lite" in kind or "v5e" in kind or "v5litepod" in kind:
        return 128, 128, 512      # v5e: 128x128 MXU arrays, f32 epilogue
    if "v6" in kind or "trillium" in kind:
        return 512, 256, 512      # v6e: 128 MiB VMEM headroom
    if "v7" in kind:
        return 256, 256, 256      # v7x: 64 MiB VMEM, 2 TCs/chip
    return 256, 256, 512


def _pick_tile(dim: int, target: int, align: int) -> int:
    """Largest multiple of `align` that divides `dim` and is <= target.

    Falls back to the full dimension (always a legal 'full-dim' block)."""
    if dim <= target:
        return dim
    best = None
    t = align
    while t <= target:
        if dim % t == 0:
            best = t
        t += align
    return best if best is not None else dim


# ----------------------------------------------------------------------------
# Kernel wrappers (BlockSpecs / grid)
# ----------------------------------------------------------------------------

def fused_matmul_affine(x, w, scale, bias, *, relu, residual=None):
    """y = act((x @ w) * scale + bias [+ residual]); x:[M,K] f32, w:[K,C] bf16."""
    M, K = x.shape
    Kw, C = w.shape
    assert K == Kw
    tm_t, tn_t, tk_t = _tile_targets()

    Mp = _round_up(max(M, 1), 16)          # bf16 sublane packing
    tm = min(tm_t, Mp)
    tn = _pick_tile(C, tn_t, 128)
    tk = _pick_tile(K, tk_t, 128)

    xb = x.astype(jnp.bfloat16)
    wb = w.astype(jnp.bfloat16)
    sb = scale.astype(jnp.float32).reshape(1, C)
    bb = bias.astype(jnp.float32).reshape(1, C)
    if Mp != M:
        xb = jnp.pad(xb, ((0, Mp - M), (0, 0)))

    has_residual = residual is not None
    rb = None
    if has_residual:
        rb = residual.astype(jnp.float32)
        if Mp != M:
            rb = jnp.pad(rb, ((0, Mp - M), (0, 0)))

    gm = pl.cdiv(Mp, tm)
    gn = C // tn
    gk = K // tk

    in_specs = [
        pl.BlockSpec((tm, tk), lambda i, j, k: (i, k)),
        pl.BlockSpec((tk, tn), lambda i, j, k: (k, j)),
        pl.BlockSpec((1, tn), lambda i, j, k: (0, j)),
        pl.BlockSpec((1, tn), lambda i, j, k: (0, j)),
    ]
    args = [xb, wb, sb, bb]
    if has_residual:
        in_specs.append(pl.BlockSpec((tm, tn), lambda i, j, k: (i, j)))
        args.append(rb)

    kernel = _make_matmul_affine_kernel(bool(relu), has_residual)

    bytes_accessed = (
        2 * Mp * K * gn            # x blocks re-read per output-column tile
        + 2 * K * C * gm           # w blocks re-read per output-row tile
        + 4 * Mp * C               # output
        + (4 * Mp * C if has_residual else 0)
    )

    out = pl.pallas_call(
        kernel,
        out_shape=jax.ShapeDtypeStruct((Mp, C), jnp.float32),
        grid_spec=pltpu.PrefetchScalarGridSpec(
            num_scalar_prefetch=0,
            grid=(gm, gn, gk),
            in_specs=in_specs,
            out_specs=pl.BlockSpec((tm, tn), lambda i, j, k: (i, j)),
        ),
        compiler_params=pltpu.CompilerParams(
            dimension_semantics=("parallel", "parallel", "arbitrary")
        ),
        cost_estimate=pl.CostEstimate(
            flops=2 * M * K * C,
            transcendentals=0,
            bytes_accessed=int(bytes_accessed),
        ),
    )(*args)

    return out[:M] if Mp != M else out


def _im2col(x, kh, kw, stride, pad):
    """x: NHWC. Returns ([N*Ho*Wo, kh*kw*C], Ho, Wo) with (kh,kw,C) ordering."""
    N, H, W, C = x.shape
    Ho = (H + 2 * pad - kh) // stride + 1
    Wo = (W + 2 * pad - kw) // stride + 1
    xp = jnp.pad(x, ((0, 0), (pad, pad), (pad, pad), (0, 0)))
    patches = []
    for i in range(kh):
        for j in range(kw):
            patches.append(
                xp[:, i : i + stride * Ho : stride, j : j + stride * Wo : stride, :]
            )
    col = jnp.stack(patches, axis=3)                # [N,Ho,Wo,kh*kw,C]
    col = col.reshape(N * Ho * Wo, kh * kw * C)
    return col, Ho, Wo


def conv_bn_act(x, p, *, stride, pad, relu, residual=None):
    """Conv2d(bias=False) + BatchNorm(eval, folded) [+ residual] [+ ReLU].

    x: NHWC. p["w"]: pre-transposed bf16 weight [kh*kw*C_in, C_out].
    """
    N = x.shape[0]
    kh, kw, c_out = p["kh"], p["kw"], p["cout"]

    if kh == 1 and kw == 1:
        # 1x1 conv: no im2col -- strided slice + reshape only.
        xs = x if stride == 1 else x[:, ::stride, ::stride, :]
        Ho, Wo = xs.shape[1], xs.shape[2]
        col = xs.reshape(N * Ho * Wo, xs.shape[3])
    else:
        col, Ho, Wo = _im2col(x, kh, kw, stride, pad)

    res_flat = residual.reshape(-1, c_out) if residual is not None else None
    y = fused_matmul_affine(
        col, p["w"], p["scale"], p["bias"], relu=relu, residual=res_flat
    )
    return y.reshape(N, Ho, Wo, c_out)


def maxpool_3x3_s2_p1(x):
    """MaxPool2d(kernel=3, stride=2, padding=1) on NHWC input (tiled over rows)."""
    N, H, W, C = x.shape
    Ho = (H + 2 - 3) // 2 + 1
    Wo = (W + 2 - 3) // 2 + 1
    xp = jnp.pad(x, ((0, 0), (1, 1), (1, 1), (0, 0)), constant_values=-jnp.inf)
    patches = []
    for i in range(3):
        for j in range(3):
            patches.append(xp[:, i : i + 2 * Ho : 2, j : j + 2 * Wo : 2, :])
    M = N * Ho * Wo
    stk = jnp.stack(patches, axis=0).reshape(9, M, C)

    Mp = _round_up(M, 8)
    if Mp != M:
        stk = jnp.pad(stk, ((0, 0), (0, Mp - M), (0, 0)))
    tm = min(512, Mp)

    out = pl.pallas_call(
        _maxpool_kernel,
        out_shape=jax.ShapeDtypeStruct((Mp, C), x.dtype),
        grid_spec=pltpu.PrefetchScalarGridSpec(
            num_scalar_prefetch=0,
            grid=(pl.cdiv(Mp, tm),),
            in_specs=[pl.BlockSpec((9, tm, C), lambda i: (0, i, 0))],
            out_specs=pl.BlockSpec((tm, C), lambda i: (i, 0)),
        ),
        compiler_params=pltpu.CompilerParams(dimension_semantics=("parallel",)),
    )(stk)
    out = out[:M] if Mp != M else out
    return out.reshape(N, Ho, Wo, C)


def global_avgpool(x):
    """AdaptiveAvgPool2d((1,1)) + flatten on NHWC input -> [N, C] (tiled over C)."""
    N, H, W, C = x.shape
    xr = x.reshape(N, H * W, C)
    if C % 512 == 0:
        tc = 512
    elif C % 128 == 0:
        tc = 128
    else:
        tc = C
    return pl.pallas_call(
        _avgpool_kernel,
        out_shape=jax.ShapeDtypeStruct((N, C), x.dtype),
        grid_spec=pltpu.PrefetchScalarGridSpec(
            num_scalar_prefetch=0,
            grid=(C // tc,),
            in_specs=[pl.BlockSpec((N, H * W, tc), lambda j: (0, 0, j))],
            out_specs=pl.BlockSpec((N, tc), lambda j: (0, j)),
        ),
        compiler_params=pltpu.CompilerParams(dimension_semantics=("parallel",)),
    )(xr)


# ----------------------------------------------------------------------------
# Parameter initialization (deterministic, synthetic)
# ----------------------------------------------------------------------------

def _key_stream(key, n=1024):
    keys = jax.random.split(key, n)
    it = iter(keys)
    return lambda: next(it)


def init_conv_bn(nk, c_out, c_in, kh, kw):
    fan_in = c_in * kh * kw
    w = jax.random.normal(nk(), (c_out, c_in, kh, kw), jnp.float32) * math.sqrt(
        2.0 / fan_in
    )
    gamma = 1.0 + 0.1 * jax.random.normal(nk(), (c_out,), jnp.float32)
    beta = 0.05 * jax.random.normal(nk(), (c_out,), jnp.float32)
    r_mean = 0.05 * jax.random.normal(nk(), (c_out,), jnp.float32)
    r_var = jax.random.uniform(nk(), (c_out,), jnp.float32, 0.8, 1.2)
    eps = 1e-5
    scale = gamma / jnp.sqrt(r_var + eps)
    bias = beta - r_mean * scale
    # Pre-transform ONCE at init: [C_out,C_in,kh,kw] -> [kh*kw*C_in, C_out], bf16.
    w_mat = (
        jnp.transpose(w, (2, 3, 1, 0))
        .reshape(kh * kw * c_in, c_out)
        .astype(jnp.bfloat16)
    )
    return {
        "w": w_mat,
        "scale": scale.reshape(1, c_out),
        "bias": bias.reshape(1, c_out),
        "kh": kh,
        "kw": kw,
        "cout": c_out,
    }


def init_bottleneck(nk, in_c, block_c, stride):
    return {
        "stride": stride,
        "in_c": in_c,
        "out_c": block_c * 4,
        "conv1": init_conv_bn(nk, block_c, in_c, 1, 1),
        "conv2": init_conv_bn(nk, block_c, block_c, 3, 3),
        "conv3": init_conv_bn(nk, block_c * 4, block_c, 1, 1),
        "down": init_conv_bn(nk, block_c * 4, in_c, 1, 1),
    }


def make_params(key):
    nk = _key_stream(key, 1024)
    params = {}
    params["first"] = init_conv_bn(nk, 64, 3, 7, 7)

    # Matches the Lab4 module (stride=2 on every bottleneck of layer2/3/4).
    layer_cfgs = {
        "layer1": [(64, 64, 1), (256, 64, 1), (256, 64, 1)],
        "layer2": [(256, 128, 2), (512, 128, 2), (512, 128, 2), (512, 128, 2)],
        "layer3": [(512, 256, 2)] + [(1024, 256, 2)] * 5,
        "layer4": [(1024, 512, 2), (2048, 512, 2), (2048, 512, 2)],
    }
    for name, cfg in layer_cfgs.items():
        params[name] = [init_bottleneck(nk, ic, bc, s) for (ic, bc, s) in cfg]

    lim = 1.0 / math.sqrt(2048.0)
    wfc = jax.random.uniform(nk(), (5, 2048), jnp.float32, -lim, lim)
    bfc = jax.random.uniform(nk(), (5,), jnp.float32, -lim, lim)
    # Pre-transpose + pre-cast fc weight to [2048, 5] bf16.
    params["fc"] = (wfc.T.astype(jnp.bfloat16), bfc.reshape(1, 5))
    return params


# ----------------------------------------------------------------------------
# Forward pass
# ----------------------------------------------------------------------------

def bottleneck_forward(x, p):
    stride = p["stride"]
    in_c = x.shape[-1]
    out_c = p["out_c"]

    out = conv_bn_act(x, p["conv1"], stride=1, pad=0, relu=True)
    out = conv_bn_act(out, p["conv2"], stride=stride, pad=1, relu=True)

    if (stride != 1) or (in_c != out_c):
        residual = conv_bn_act(x, p["down"], stride=stride, pad=0, relu=False)
    else:
        residual = x

    # conv3 + BN + residual add + ReLU, all fused in one Pallas kernel.
    out = conv_bn_act(
        out, p["conv3"], stride=1, pad=0, relu=True, residual=residual
    )
    return out


def resnet50_forward(params, x_nchw):
    # NCHW (PyTorch convention) -> NHWC for the TPU kernels.
    x = jnp.transpose(x_nchw, (0, 2, 3, 1)).astype(jnp.float32)

    # first: Conv7x7/2 + BN + ReLU + MaxPool3x3/2
    x = conv_bn_act(x, params["first"], stride=2, pad=3, relu=True)
    x = maxpool_3x3_s2_p1(x)

    for layer_name in ("layer1", "layer2", "layer3", "layer4"):
        for blk in params[layer_name]:
            x = bottleneck_forward(x, blk)

    x = global_avgpool(x)                       # [N, 2048]

    wfc, bfc = params["fc"]                     # wfc: [2048, 5] bf16
    ones = jnp.ones((1, wfc.shape[1]), jnp.float32)
    logits = fused_matmul_affine(x, wfc, ones, bfc, relu=False)
    return logits                               # [N, 5]


# ----------------------------------------------------------------------------
# Main
# ----------------------------------------------------------------------------

if __name__ == "__main__":
    root = jax.random.PRNGKey(0)
    pkey, xkey = jax.random.split(root)

    params = make_params(pkey)
    # Small, module-consistent input: batch=2, 3 channels, 16x16 spatial (NCHW).
    x = jax.random.normal(xkey, (2, 3, 16, 16), jnp.float32)

    logits = resnet50_forward(params, x)
    logits = jax.block_until_ready(logits)

    assert logits.shape == (2, 5), logits.shape
    assert bool(jnp.all(jnp.isfinite(logits)))
    print("KERNEL_OK")
</pallas_src>

<mosaic_0001>
module attributes {stable_mosaic.version = 11 : i64} {
  func.func @kernel(%arg0: i32, %arg1: i32, %arg2: i32, %arg3: memref<128x147xbf16, #tpu.memory_space<vmem>>, %arg4: memref<147x64xbf16, #tpu.memory_space<vmem>>, %arg5: memref<1x64xf32, #tpu.memory_space<vmem>>, %arg6: memref<1x64xf32, #tpu.memory_space<vmem>>, %arg7: memref<128x64xf32, #tpu.memory_space<vmem>>) attributes {dimension_semantics = [#tpu.dimension_semantics<parallel>, #tpu.dimension_semantics<parallel>, #tpu.dimension_semantics<arbitrary>], iteration_bounds = array<i64: 1, 1, 1>, scalar_prefetch = 0 : i64, scratch_operands = 0 : i64, tpu.core_type = #tpu.core_type<tc>, window_params = [{transform_indices = @transform_0, window_bounds = array<i64: 128, 147>}, {transform_indices = @transform_1, window_bounds = array<i64: 147, 64>}, {transform_indices = @transform_2, window_bounds = array<i64: 1, 64>}, {transform_indices = @transform_3, window_bounds = array<i64: 1, 64>}, {transform_indices = @transform_4, window_bounds = array<i64: 128, 64>}]} {
    %c0_i32 = arith.constant 0 : i32
    %0 = arith.cmpi eq, %arg2, %c0_i32 : i32
    %1 = arith.extui %0 : i1 to i32
    %c0_i32_0 = arith.constant 0 : i32
    %2 = arith.cmpi ne, %1, %c0_i32_0 : i32
    scf.if %2 {
      %cst_10 = arith.constant 0.000000e+00 : f32
      %12 = vector.broadcast %cst_10 : f32 to vector<128x64xf32>
      %c0_11 = arith.constant 0 : index
      %c0_12 = arith.constant 0 : index
      %13 = vector.load %arg7[%c0_11, %c0_12] : memref<128x64xf32, #tpu.memory_space<vmem>>, vector<128x64xf32>
      tpu.vector_store %arg7[%c0_11, %c0_12], %12 {strides = array<i32>} : memref<128x64xf32, #tpu.memory_space<vmem>>, vector<128x64xf32>,
    } else {
    }
    %c0 = arith.constant 0 : index
    %c0_1 = arith.constant 0 : index
    %3 = vector.load %arg7[%c0, %c0_1] : memref<128x64xf32, #tpu.memory_space<vmem>>, vector<128x64xf32>
    %c0_2 = arith.constant 0 : index
    %c0_3 = arith.constant 0 : index
    %4 = vector.load %arg3[%c0_2, %c0_3] : memref<128x147xbf16, #tpu.memory_space<vmem>>, vector<128x147xbf16>
    %c0_4 = arith.constant 0 : index
    %c0_5 = arith.constant 0 : index
    %5 = vector.load %arg4[%c0_4, %c0_5] : memref<147x64xbf16, #tpu.memory_space<vmem>>, vector<147x64xbf16>
    %cst = arith.constant dense<0.000000e+00> : vector<128x64xf32>
    %6 = tpu.matmul %4, %5, %cst {dimension_numbers = #tpu.dot_dimension_numbers<[1], [0], [0], [1], [0, 0, 1, 1], [], []>} : vector<128x147xbf16>, vector<147x64xbf16>, vector<128x64xf32> -> vector<128x64xf32>
    %7 = arith.addf %3, %6 : vector<128x64xf32>
    %c0_6 = arith.constant 0 : index
    %c0_7 = arith.constant 0 : index
    %8 = vector.load %arg7[%c0_6, %c0_7] : memref<128x64xf32, #tpu.memory_space<vmem>>, vector<128x64xf32>
    tpu.vector_store %arg7[%c0_6, %c0_7], %7 {strides = array<i32>} : memref<128x64xf32, #tpu.memory_space<vmem>>, vector<128x64xf32>,
    %c0_i32_8 = arith.constant 0 : i32
    %9 = arith.cmpi eq, %arg2, %c0_i32_8 : i32
    %10 = arith.extui %9 : i1 to i32
    %c0_i32_9 = arith.constant 0 : i32
    %11 = arith.cmpi ne, %10, %c0_i32_9 : i32
    scf.if %11 {
      %c0_10 = arith.constant 0 : index
      %c0_11 = arith.constant 0 : index
      %12 = vector.load %arg7[%c0_10, %c0_11] : memref<128x64xf32, #tpu.memory_space<vmem>>, vector<128x64xf32>
      %c0_12 = arith.constant 0 : index
      %c0_13 = arith.constant 0 : index
      %13 = vector.load %arg5[%c0_12, %c0_13] : memref<1x64xf32, #tpu.memory_space<vmem>>, vector<1x64xf32>
      %14 = vector.broadcast %13 : vector<1x64xf32> to vector<128x64xf32>
      %15 = arith.mulf %12, %14 : vector<128x64xf32>
      %c0_14 = arith.constant 0 : index
      %c0_15 = arith.constant 0 : index
      %16 = vector.load %arg6[%c0_14, %c0_15] : memref<1x64xf32, #tpu.memory_space<vmem>>, vector<1x64xf32>
      %17 = vector.broadcast %16 : vector<1x64xf32> to vector<128x64xf32>
      %18 = arith.addf %15, %17 : vector<128x64xf32>
      %cst_16 = arith.constant 0.000000e+00 : f32
      %19 = vector.broadcast %cst_16 : f32 to vector<128x64xf32>
      %20 = arith.maximumf %18, %19 : vector<128x64xf32>
      %c0_17 = arith.constant 0 : index
      %c0_18 = arith.constant 0 : index
      %21 = vector.load %arg7[%c0_17, %c0_18] : memref<128x64xf32, #tpu.memory_space<vmem>>, vector<128x64xf32>
      tpu.vector_store %arg7[%c0_17, %c0_18], %20 {strides = array<i32>} : memref<128x64xf32, #tpu.memory_space<vmem>>, vector<128x64xf32>,
    } else {
    }
    return
  }
  func.func @transform_0(%arg0: i32, %arg1: i32, %arg2: i32) -> (i32, i32) {
    %c0_i32 = arith.constant 0 : i32
    return %arg0, %arg2 : i32, i32
  }
  func.func @transform_1(%arg0: i32, %arg1: i32, %arg2: i32) -> (i32, i32) {
    %c0_i32 = arith.constant 0 : i32
    return %arg2, %arg1 : i32, i32
  }
  func.func @transform_2(%arg0: i32, %arg1: i32, %arg2: i32) -> (i32, i32) {
    %c0_i32 = arith.constant 0 : i32
    %c0_i32_0 = arith.constant 0 : i32
    return %c0_i32, %arg1 : i32, i32
  }
  func.func @transform_3(%arg0: i32, %arg1: i32, %arg2: i32) -> (i32, i32) {
    %c0_i32 = arith.constant 0 : i32
    %c0_i32_0 = arith.constant 0 : i32
    return %c0_i32, %arg1 : i32, i32
  }
  func.func @transform_4(%arg0: i32, %arg1: i32, %arg2: i32) -> (i32, i32) {
    %c0_i32 = arith.constant 0 : i32
    return %arg0, %arg1 : i32, i32
  }
}

</mosaic_0001>

<llo_original>
// kernel: tpu_custom_call.1
$region0: #{tpu_custom_call.1}
  #allocation0 [shape = 'u32[]', space=smem, size = 0x4, offset = 0x4, fixed_abs, tag = 'smem constant byte address 0x4 - core index']
  #allocation1 [shape = 'u32[144,128]{1,0:T(1,128)}', space=vmem, size = 0x12000, scoped, tag = 'internal scratch']
  %s0 = inlined_call_operand.vmem [shape: bf16[128,147], index: 0, kind: input, shape index: {}]
  %s1 = inlined_call_operand.vmem [shape: bf16[147,64], index: 1, kind: input, shape index: {}]
  %s2 = inlined_call_operand.vmem [shape: f32[1,64], index: 2, kind: input, shape index: {}]
  %s3 = inlined_call_operand.vmem [shape: f32[1,64], index: 3, kind: input, shape index: {}]
  %s4 = inlined_call_operand.vmem [shape: f32[128,64], index: 4, kind: output, shape index: {}]
  %s5 = sld [smem:[#allocation0]]
  $region34: #{tpu_custom_call.1} parent=0
    _
  %s7 = ssub.s32 1, %s5
  %s8 = scalar_select 0, %s7, %s5
  // Predicated region
  $region2: #{tpu_custom_call.1} parent=0 // pred_check
    _
  $region3: #{tpu_custom_call.1} parent=0 // pred_check_branch
    %10 = sbr.rel (0) target = $region5
  $region4: #{tpu_custom_call.1} parent=0 // pred_region
    _
  $region5: #{tpu_custom_call.1} parent=0 // pred_fallthru
    _
  // Predicated region
  $region6: #{tpu_custom_call.1} parent=0 // pred_check
    _
  $region7: #{tpu_custom_call.1} parent=0 // pred_check_branch
    %12 = sbr.rel (0) target = $region9
  $region8: #{tpu_custom_call.1} parent=0 // pred_region
    _
  $region9: #{tpu_custom_call.1} parent=0 // pred_fallthru
    _
  // Predicated region
  $region10: #{tpu_custom_call.1} parent=0 // pred_check
    _
  $region11: #{tpu_custom_call.1} parent=0 // pred_check_branch
    %14 = sbr.rel (0) target = $region13
  $region12: #{tpu_custom_call.1} parent=0 // pred_region
    _
  $region13: #{tpu_custom_call.1} parent=0 // pred_fallthru
    _
  // Predicated region
  $region14: #{tpu_custom_call.1} parent=0 // pred_check
    _
  $region15: #{tpu_custom_call.1} parent=0 // pred_check_branch
    %16 = sbr.rel (0) target = $region17
  $region16: #{tpu_custom_call.1} parent=0 // pred_region
    _
  $region17: #{tpu_custom_call.1} parent=0 // pred_fallthru
    _
  %p18 = scmp.eq.s32.totalorder 0, 0
  // Predicated region
  $region18: #{tpu_custom_call.1} parent=0 // pred_check
    %p19 = pneg %p18
  $region19: #{tpu_custom_call.1} parent=0 // pred_check_branch
    %21 = sbr.rel (%p19) target = $region21
  $region20: #{tpu_custom_call.1} parent=0 // pred_region
    %vm22 = vcmask 523264
    %23 = vst.msk [vmem:[%s4] sm:$0xff] %vm22, 0.0
    %24 = vst.msk [vmem:[%s4 + $0x8] sm:$0xff] %vm22, 0.0
    %25 = vst.msk [vmem:[%s4 + $0x10] sm:$0xff] %vm22, 0.0
    %26 = vst.msk [vmem:[%s4 + $0x18] sm:$0xff] %vm22, 0.0
    %27 = vst.msk [vmem:[%s4 + $0x20] sm:$0xff] %vm22, 0.0
    %28 = vst.msk [vmem:[%s4 + $0x28] sm:$0xff] %vm22, 0.0
    %29 = vst.msk [vmem:[%s4 + $0x30] sm:$0xff] %vm22, 0.0
    %30 = vst.msk [vmem:[%s4 + $0x38] sm:$0xff] %vm22, 0.0
    %31 = vst.msk [vmem:[%s4 + $0x40] sm:$0xff] %vm22, 0.0
    %32 = vst.msk [vmem:[%s4 + $0x48] sm:$0xff] %vm22, 0.0
    %33 = vst.msk [vmem:[%s4 + $0x50] sm:$0xff] %vm22, 0.0
    %34 = vst.msk [vmem:[%s4 + $0x58] sm:$0xff] %vm22, 0.0
    %35 = vst.msk [vmem:[%s4 + $0x60] sm:$0xff] %vm22, 0.0
    %36 = vst.msk [vmem:[%s4 + $0x68] sm:$0xff] %vm22, 0.0
    %37 = vst.msk [vmem:[%s4 + $0x70] sm:$0xff] %vm22, 0.0
    %38 = vst.msk [vmem:[%s4 + $0x78] sm:$0xff] %vm22, 0.0
  $region21: #{tpu_custom_call.1} parent=0 // pred_fallthru
    _
  %v39 = vld [vmem:[%s4] sm:$0xff]
  %v40 = vld [vmem:[%s4 + $0x8] sm:$0xff]
  %v41 = vld [vmem:[%s4 + $0x10] sm:$0xff]
  %v42 = vld [vmem:[%s4 + $0x18] sm:$0xff]
  %v43 = vld [vmem:[%s4 + $0x20] sm:$0xff]
  %v44 = vld [vmem:[%s4 + $0x28] sm:$0xff]
  %v45 = vld [vmem:[%s4 + $0x30] sm:$0xff]
  %v46 = vld [vmem:[%s4 + $0x38] sm:$0xff]
  %v47 = vld [vmem:[%s4 + $0x40] sm:$0xff]
  %v48 = vld [vmem:[%s4 + $0x48] sm:$0xff]
  %v49 = vld [vmem:[%s4 + $0x50] sm:$0xff]
  %v50 = vld [vmem:[%s4 + $0x58] sm:$0xff]
  %v51 = vld [vmem:[%s4 + $0x60] sm:$0xff]
  %v52 = vld [vmem:[%s4 + $0x68] sm:$0xff]
  %v53 = vld [vmem:[%s4 + $0x70] sm:$0xff]
  %v54 = vld [vmem:[%s4 + $0x78] sm:$0xff]
  %v55 = vld [vmem:[%s0] sm:$0xff]
  %v56 = vld [vmem:[%s0 + $0x8] sm:$0xff]
  %v57 = vld [vmem:[%s0 + $0x10] sm:$0xff]
  %v58 = vld [vmem:[%s0 + $0x18] sm:$0xff]
  %v59 = vld [vmem:[%s0 + $0x20] sm:$0xff]
  %v60 = vld [vmem:[%s0 + $0x28] sm:$0xff]
  %v61 = vld [vmem:[%s0 + $0x30] sm:$0xff]
  %v62 = vld [vmem:[%s0 + $0x38] sm:$0xff]
  %v63 = vld [vmem:[%s0 + $0x40] sm:$0xff]
  %v64 = vld [vmem:[%s0 + $0x48] sm:$0xff]
  %v65 = vld [vmem:[%s0 + $0x50] sm:$0xff]
  %v66 = vld [vmem:[%s0 + $0x58] sm:$0xff]
  %v67 = vld [vmem:[%s0 + $0x60] sm:$0xff]
  %v68 = vld [vmem:[%s0 + $0x68] sm:$0xff]
  %v69 = vld [vmem:[%s0 + $0x70] sm:$0xff]
  %v70 = vld [vmem:[%s0 + $0x78] sm:$0xff]
  %v71 = vld [vmem:[%s1] sm:$0xf]
  %v72 = vld [vmem:[%s1 + $0x4] sm:$0xf]
  %v73 = vld [vmem:[%s1 + $0x8] sm:$0xf]
  %v74 = vld [vmem:[%s1 + $0xc] sm:$0xf]
  %v75 = vld [vmem:[%s1 + $0x10] sm:$0xf]
  %v76 = vld [vmem:[%s1 + $0x14] sm:$0xf]
  %v77 = vld [vmem:[%s1 + $0x18] sm:$0xf]
  %v78 = vld [vmem:[%s1 + $0x1c] sm:$0xf]
  %v79 = vld [vmem:[%s1 + $0x20] sm:$0xf]
  %v80 = vld [vmem:[%s1 + $0x24] sm:$0xf]
  %v81 = vld [vmem:[%s1 + $0x28] sm:$0xf]
  %v82 = vld [vmem:[%s1 + $0x2c] sm:$0xf]
  %v83 = vld [vmem:[%s1 + $0x30] sm:$0xf]
  %v84 = vld [vmem:[%s1 + $0x34] sm:$0xf]
  %v85 = vld [vmem:[%s1 + $0x38] sm:$0xf]
  %v86 = vld [vmem:[%s1 + $0x3c] sm:$0xf]
  %v87 = vld [vmem:[%s1 + $0x40] sm:$0xf]
  %v88 = vld [vmem:[%s1 + $0x44] sm:$0xf]
  %v89 = vld [vmem:[%s1 + $0x48] sm:$0x3]
  %v106 = vunpack.c.l.b16 %v55
  %v107 = vunpack.c.h.b16 %v55
  %v108 = vunpack.c.l.b16 %v56
  %v109 = vunpack.c.h.b16 %v56
  %v110 = vunpack.c.l.b16 %v57
  %v111 = vunpack.c.h.b16 %v57
  %v112 = vunpack.c.l.b16 %v58
  %v113 = vunpack.c.h.b16 %v58
  %v114 = vunpack.c.l.b16 %v59
  %v115 = vunpack.c.h.b16 %v59
  %v116 = vunpack.c.l.b16 %v60
  %v117 = vunpack.c.h.b16 %v60
  %v118 = vunpack.c.l.b16 %v61
  %v119 = vunpack.c.h.b16 %v61
  %v120 = vunpack.c.l.b16 %v62
  %v121 = vunpack.c.h.b16 %v62
  %v122 = vunpack.c.l.b16 %v63
  %v123 = vunpack.c.h.b16 %v63
  %v124 = vunpack.c.l.b16 %v64
  %v125 = vunpack.c.h.b16 %v64
  %v126 = vunpack.c.l.b16 %v65
  %v127 = vunpack.c.h.b16 %v65
  %v128 = vunpack.c.l.b16 %v66
  %v129 = vunpack.c.h.b16 %v66
  %v130 = vunpack.c.l.b16 %v67
  %v131 = vunpack.c.h.b16 %v67
  %v132 = vunpack.c.l.b16 %v68
  %v133 = vunpack.c.h.b16 %v68
  %v134 = vunpack.c.l.b16 %v69
  %v135 = vunpack.c.h.b16 %v69
  %v136 = vunpack.c.l.b16 %v70
  %v137 = vunpack.c.h.b16 %v70
  %v138 = vpack.c.b16 %v108, %v106
  %v139 = vpack.c.b16 %v109, %v107
  %v140 = vpack.c.b16 %v112, %v110
  %v141 = vpack.c.b16 %v113, %v111
  %v142 = vpack.c.b16 %v116, %v114
  %v143 = vpack.c.b16 %v117, %v115
  %v144 = vpack.c.b16 %v120, %v118
  %v145 = vpack.c.b16 %v121, %v119
  %v146 = vpack.c.b16 %v124, %v122
  %v147 = vpack.c.b16 %v125, %v123
  %v148 = vpack.c.b16 %v128, %v126
  %v149 = vpack.c.b16 %v129, %v127
  %v150 = vpack.c.b16 %v132, %v130
  %v151 = vpack.c.b16 %v133, %v131
  %v152 = vpack.c.b16 %v136, %v134
  %v153 = vpack.c.b16 %v137, %v135
  %v181 = vunpack.c.l.b16 %v71
  %v182 = vunpack.c.l.b16 %v72
  %v183 = vunpack.c.l.b16 %v73
  %v184 = vunpack.c.l.b16 %v74
  %v185 = vunpack.c.l.b16 %v75
  %v186 = vunpack.c.l.b16 %v76
  %v187 = vunpack.c.l.b16 %v77
  %v188 = vunpack.c.l.b16 %v78
  %v189 = vunpack.c.l.b16 %v79
  %v190 = vunpack.c.l.b16 %v80
  %v191 = vunpack.c.l.b16 %v81
  %v192 = vunpack.c.l.b16 %v82
  %v193 = vunpack.c.l.b16 %v83
  %v194 = vunpack.c.l.b16 %v84
  %v195 = vunpack.c.l.b16 %v85
  %v196 = vunpack.c.l.b16 %v86
  %v197 = vunpack.c.l.b16 %v87
  %v198 = vunpack.c.l.b16 %v88
  %v199 = vunpack.c.l.b16 %v89
  %v200 = vpack.c.b16 %v182, %v181
  %v201 = vpack.c.b16 %v184, %v183
  %v202 = vpack.c.b16 %v186, %v185
  %v203 = vpack.c.b16 %v188, %v187
  %v204 = vpack.c.b16 %v190, %v189
  %v205 = vpack.c.b16 %v192, %v191
  %v206 = vpack.c.b16 %v194, %v193
  %v207 = vpack.c.b16 %v196, %v195
  %v208 = vpack.c.b16 %v198, %v197
  %v209 = vpack.c.b16 %v199, %v199
  %vm219 = vcmask 154624
  %v221 = vsel %vm219, %v139, 0
  %v224 = vsel %vm219, %v141, 0
  %v227 = vsel %vm219, %v143, 0
  %v230 = vsel %vm219, %v145, 0
  %v233 = vsel %vm219, %v147, 0
  %v236 = vsel %vm219, %v149, 0
  %v239 = vsel %vm219, %v151, 0
  %v242 = vsel %vm219, %v153, 0
  %vm244 = vcmask 1040384
  %vm245 = vcmask 1041408
  %v246 = vsel %vm244, 4294967295, 65535
  %v247 = vsel %vm245, %v246, 0
  %v249 = vand.u32 %v209, %v247
  %251 = vmatprep.subr.bf16.mxu0 0
  %252 = vmatpush1.bf16.msra.mxu0 %v207
  %253 = vmatprep.subr.bf16.mxu0 0
  %254 = vmatpush1.bf16.msra.mxu0 %v206
  %255 = vmatprep.subr.bf16.mxu0 0
  %256 = vmatpush1.bf16.msra.mxu0 %v205
  %257 = vmatprep.subr.bf16.mxu0 0
  %258 = vmatpush1.bf16.msra.mxu0 %v204
  %259 = vmatprep.subr.bf16.mxu0 0
  %260 = vmatpush1.bf16.msra.mxu0 %v203
  %261 = vmatprep.subr.bf16.mxu0 0
  %262 = vmatpush1.bf16.msra.mxu0 %v202
  %263 = vmatprep.subr.bf16.mxu0 0
  %264 = vmatpush1.bf16.msra.mxu0 %v201
  %265 = vmatprep.subr.bf16.mxu0 0
  %266 = vmatpush1.bf16.msra.mxu0 %v200
  %267 = vmatprep.subr.bf16.mxu0 0
  %268 = vmatpush2.bf16.msra.mxu0 0
  %269 = vmatprep.subr.bf16.mxu0 0
  %270 = vmatpush2.bf16.msra.mxu0 0
  %271 = vmatprep.subr.bf16.mxu0 0
  %272 = vmatpush2.bf16.msra.mxu0 0
  %273 = vmatprep.subr.bf16.mxu0 0
  %274 = vmatpush2.bf16.msra.mxu0 0
  %275 = vmatprep.subr.bf16.mxu0 0
  %276 = vmatpush2.bf16.msra.mxu0 0
  %277 = vmatprep.subr.bf16.mxu0 0
  %278 = vmatpush2.bf16.msra.mxu0 0
  %279 = vmatprep.subr.bf16.mxu0 0
  %280 = vmatpush2.bf16.msra.mxu0 %v249
  %281 = vmatprep.subr.bf16.mxu0 0
  %282 = vmatpush2.bf16.msra.mxu0 %v208
  %283 = vmatprep.mubr.bf16.mxu0 %v221
  %284 = vmatmul.mubr.bf16.gmra.mxu0 %v138
  %v285 = vpop.f32.mrf.mxu0
  %v286 = vadd.f32 0.0, %v285
  %v287 = vpop.f32.mrf.mxu0
  %v288 = vpop.f32.mrf.mxu0
  %v289 = vadd.f32 0.0, %v288
  %v290 = vpop.f32.mrf.mxu0
  %291 = vmatprep.mubr.bf16.mxu0 %v224
  %292 = vmatmul.mubr.bf16.gmra.mxu0 %v140
  %v293 = vpop.f32.mrf.mxu0
  %v294 = vadd.f32 0.0, %v293
  %v295 = vpop.f32.mrf.mxu0
  %v296 = vpop.f32.mrf.mxu0
  %v297 = vadd.f32 0.0, %v296
  %v298 = vpop.f32.mrf.mxu0
  %299 = vmatprep.mubr.bf16.mxu0 %v227
  %300 = vmatmul.mubr.bf16.gmra.mxu0 %v142
  %v301 = vpop.f32.mrf.mxu0
  %v302 = vadd.f32 0.0, %v301
  %v303 = vpop.f32.mrf.mxu0
  %v304 = vpop.f32.mrf.mxu0
  %v305 = vadd.f32 0.0, %v304
  %v306 = vpop.f32.mrf.mxu0
  %307 = vmatprep.mubr.bf16.mxu0 %v230
  %308 = vmatmul.mubr.bf16.gmra.mxu0 %v144
  %v309 = vpop.f32.mrf.mxu0
  %v310 = vadd.f32 0.0, %v309
  %v311 = vpop.f32.mrf.mxu0
  %v312 = vpop.f32.mrf.mxu0
  %v313 = vadd.f32 0.0, %v312
  %v314 = vpop.f32.mrf.mxu0
  %315 = vmatprep.mubr.bf16.mxu0 %v233
  %316 = vmatmul.mubr.bf16.gmra.mxu0 %v146
  %v317 = vpop.f32.mrf.mxu0
  %v318 = vadd.f32 0.0, %v317
  %v319 = vpop.f32.mrf.mxu0
  %v320 = vpop.f32.mrf.mxu0
  %v321 = vadd.f32 0.0, %v320
  %v322 = vpop.f32.mrf.mxu0
  %323 = vmatprep.mubr.bf16.mxu0 %v236
  %324 = vmatmul.mubr.bf16.gmra.mxu0 %v148
  %v325 = vpop.f32.mrf.mxu0
  %v326 = vadd.f32 0.0, %v325
  %v327 = vpop.f32.mrf.mxu0
  %v328 = vpop.f32.mrf.mxu0
  %v329 = vadd.f32 0.0, %v328
  %v330 = vpop.f32.mrf.mxu0
  %331 = vmatprep.mubr.bf16.mxu0 %v239
  %332 = vmatmul.mubr.bf16.gmra.mxu0 %v150
  %v333 = vpop.f32.mrf.mxu0
  %v334 = vadd.f32 0.0, %v333
  %v335 = vpop.f32.mrf.mxu0
  %v336 = vpop.f32.mrf.mxu0
  %v337 = vadd.f32 0.0, %v336
  %v338 = vpop.f32.mrf.mxu0
  %339 = vmatprep.mubr.bf16.mxu0 %v242
  %340 = vmatmul.mubr.bf16.gmra.mxu0 %v152
  %v341 = vpop.f32.mrf.mxu0
  %v342 = vadd.f32 0.0, %v341
  %v343 = vpop.f32.mrf.mxu0
  %v344 = vpop.f32.mrf.mxu0
  %v345 = vadd.f32 0.0, %v344
  %v346 = vpop.f32.mrf.mxu0
  %347 = vdwg.mxu0
  %v348 = vadd.f32 %v39, %v286
  %v349 = vadd.f32 %v40, %v289
  %v350 = vadd.f32 %v41, %v294
  %v351 = vadd.f32 %v42, %v297
  %v352 = vadd.f32 %v43, %v302
  %v353 = vadd.f32 %v44, %v305
  %v354 = vadd.f32 %v45, %v310
  %v355 = vadd.f32 %v46, %v313
  %v356 = vadd.f32 %v47, %v318
  %v357 = vadd.f32 %v48, %v321
  %v358 = vadd.f32 %v49, %v326
  %v359 = vadd.f32 %v50, %v329
  %v360 = vadd.f32 %v51, %v334
  %v361 = vadd.f32 %v52, %v337
  %v362 = vadd.f32 %v53, %v342
  %v363 = vadd.f32 %v54, %v345
  %vm364 = vcmask 523264
  %365 = vst.msk [vmem:[%s4] sm:$0xff] %vm364, %v348
  %366 = vst.msk [vmem:[%s4 + $0x8] sm:$0xff] %vm364, %v349
  %367 = vst.msk [vmem:[%s4 + $0x10] sm:$0xff] %vm364, %v350
  %368 = vst.msk [vmem:[%s4 + $0x18] sm:$0xff] %vm364, %v351
  %369 = vst.msk [vmem:[%s4 + $0x20] sm:$0xff] %vm364, %v352
  %370 = vst.msk [vmem:[%s4 + $0x28] sm:$0xff] %vm364, %v353
  %371 = vst.msk [vmem:[%s4 + $0x30] sm:$0xff] %vm364, %v354
  %372 = vst.msk [vmem:[%s4 + $0x38] sm:$0xff] %vm364, %v355
  %373 = vst.msk [vmem:[%s4 + $0x40] sm:$0xff] %vm364, %v356
  %374 = vst.msk [vmem:[%s4 + $0x48] sm:$0xff] %vm364, %v357
  %375 = vst.msk [vmem:[%s4 + $0x50] sm:$0xff] %vm364, %v358
  %376 = vst.msk [vmem:[%s4 + $0x58] sm:$0xff] %vm364, %v359
  %377 = vst.msk [vmem:[%s4 + $0x60] sm:$0xff] %vm364, %v360
  %378 = vst.msk [vmem:[%s4 + $0x68] sm:$0xff] %vm364, %v361
  %379 = vst.msk [vmem:[%s4 + $0x70] sm:$0xff] %vm364, %v362
  %380 = vst.msk [vmem:[%s4 + $0x78] sm:$0xff] %vm364, %v363
  // Predicated region
  $region22: #{tpu_custom_call.1} parent=0 // pred_check
    %p381 = pneg %p18
  $region23: #{tpu_custom_call.1} parent=0 // pred_check_branch
    %383 = sbr.rel (%p381) target = $region25
  $region24: #{tpu_custom_call.1} parent=0 // pred_region
    %v384 = vld [vmem:[%s4] sm:$0xff]
    %v385 = vld [vmem:[%s4 + $0x8] sm:$0xff]
    %v386 = vld [vmem:[%s4 + $0x10] sm:$0xff]
    %v387 = vld [vmem:[%s4 + $0x18] sm:$0xff]
    %v388 = vld [vmem:[%s4 + $0x20] sm:$0xff]
    %v389 = vld [vmem:[%s4 + $0x28] sm:$0xff]
    %v390 = vld [vmem:[%s4 + $0x30] sm:$0xff]
    %v391 = vld [vmem:[%s4 + $0x38] sm:$0xff]
    %v392 = vld [vmem:[%s4 + $0x40] sm:$0xff]
    %v393 = vld [vmem:[%s4 + $0x48] sm:$0xff]
    %v394 = vld [vmem:[%s4 + $0x50] sm:$0xff]
    %v395 = vld [vmem:[%s4 + $0x58] sm:$0xff]
    %v396 = vld [vmem:[%s4 + $0x60] sm:$0xff]
    %v397 = vld [vmem:[%s4 + $0x68] sm:$0xff]
    %v398 = vld [vmem:[%s4 + $0x70] sm:$0xff]
    %v399 = vld [vmem:[%s4 + $0x78] sm:$0xff]
    %v400 = vld [vmem:[%s2] sm:$0x1]
    %v402 = vlaneseq
    %v403 = vshrl.u32 %v402, 7
    %v404 = vsub.s32 0, %v403
    %v405 = vrot.slane %v400, %v404
    %v407 = vmul.f32 %v384, %v405
    %v408 = vmul.f32 %v385, %v405
    %v409 = vmul.f32 %v386, %v405
    %v410 = vmul.f32 %v387, %v405
    %v411 = vmul.f32 %v388, %v405
    %v412 = vmul.f32 %v389, %v405
    %v413 = vmul.f32 %v390, %v405
    %v414 = vmul.f32 %v391, %v405
    %v415 = vmul.f32 %v392, %v405
    %v416 = vmul.f32 %v393, %v405
    %v417 = vmul.f32 %v394, %v405
    %v418 = vmul.f32 %v395, %v405
    %v419 = vmul.f32 %v396, %v405
    %v420 = vmul.f32 %v397, %v405
    %v421 = vmul.f32 %v398, %v405
    %v422 = vmul.f32 %v399, %v405
    %v423 = vld [vmem:[%s3] sm:$0x1]
    %v425 = vlaneseq
    %v426 = vshrl.u32 %v425, 7
    %v427 = vsub.s32 0, %v426
    %v428 = vrot.slane %v423, %v427
    %v430 = vadd.f32 %v407, %v428
    %v431 = vadd.f32 %v408, %v428
    %v432 = vadd.f32 %v409, %v428
    %v433 = vadd.f32 %v410, %v428
    %v434 = vadd.f32 %v411, %v428
    %v435 = vadd.f32 %v412, %v428
    %v436 = vadd.f32 %v413, %v428
    %v437 = vadd.f32 %v414, %v428
    %v438 = vadd.f32 %v415, %v428
    %v439 = vadd.f32 %v416, %v428
    %v440 = vadd.f32 %v417, %v428
    %v441 = vadd.f32 %v418, %v428
    %v442 = vadd.f32 %v419, %v428
    %v443 = vadd.f32 %v420, %v428
    %v444 = vadd.f32 %v421, %v428
    %v445 = vadd.f32 %v422, %v428
    %v446 = vmax.f32 %v430, 0.0
    %v447 = vmax.f32 %v431, 0.0
    %v448 = vmax.f32 %v432, 0.0
    %v449 = vmax.f32 %v433, 0.0
    %v450 = vmax.f32 %v434, 0.0
    %v451 = vmax.f32 %v435, 0.0
    %v452 = vmax.f32 %v436, 0.0
    %v453 = vmax.f32 %v437, 0.0
    %v454 = vmax.f32 %v438, 0.0
    %v455 = vmax.f32 %v439, 0.0
    %v456 = vmax.f32 %v440, 0.0
    %v457 = vmax.f32 %v441, 0.0
    %v458 = vmax.f32 %v442, 0.0
    %v459 = vmax.f32 %v443, 0.0
    %v460 = vmax.f32 %v444, 0.0
    %v461 = vmax.f32 %v445, 0.0
    %462 = vst.msk [vmem:[%s4] sm:$0xff] %vm364, %v446
    %463 = vst.msk [vmem:[%s4 + $0x8] sm:$0xff] %vm364, %v447
    %464 = vst.msk [vmem:[%s4 + $0x10] sm:$0xff] %vm364, %v448
    %465 = vst.msk [vmem:[%s4 + $0x18] sm:$0xff] %vm364, %v449
    %466 = vst.msk [vmem:[%s4 + $0x20] sm:$0xff] %vm364, %v450
    %467 = vst.msk [vmem:[%s4 + $0x28] sm:$0xff] %vm364, %v451
    %468 = vst.msk [vmem:[%s4 + $0x30] sm:$0xff] %vm364, %v452
    %469 = vst.msk [vmem:[%s4 + $0x38] sm:$0xff] %vm364, %v453
    %470 = vst.msk [vmem:[%s4 + $0x40] sm:$0xff] %vm364, %v454
    %471 = vst.msk [vmem:[%s4 + $0x48] sm:$0xff] %vm364, %v455
    %472 = vst.msk [vmem:[%s4 + $0x50] sm:$0xff] %vm364, %v456
    %473 = vst.msk [vmem:[%s4 + $0x58] sm:$0xff] %vm364, %v457
    %474 = vst.msk [vmem:[%s4 + $0x60] sm:$0xff] %vm364, %v458
    %475 = vst.msk [vmem:[%s4 + $0x68] sm:$0xff] %vm364, %v459
    %476 = vst.msk [vmem:[%s4 + $0x70] sm:$0xff] %vm364, %v460
    %477 = vst.msk [vmem:[%s4 + $0x78] sm:$0xff] %vm364, %v461
  $region25: #{tpu_custom_call.1} parent=0 // pred_fallthru
    _
  // Predicated region
  $region26: #{tpu_custom_call.1} parent=0 // pred_check
    _
  $region27: #{tpu_custom_call.1} parent=0 // pred_check_branch
    %479 = sbr.rel (0) target = $region29
  $region28: #{tpu_custom_call.1} parent=0 // pred_region
    _
  $region29: #{tpu_custom_call.1} parent=0 // pred_fallthru
    _
  // Predicated region
  $region30: #{tpu_custom_call.1} parent=0 // pred_check
    _
  $region31: #{tpu_custom_call.1} parent=0 // pred_check_branch
    %481 = sbr.rel (0) target = $region33
  $region32: #{tpu_custom_call.1} parent=0 // pred_region
    _
  $region33: #{tpu_custom_call.1} parent=0 // pred_fallthru
    _

</llo_original>
